<compile_context>
chip_gen: v5e
topology: v5e:2x2
jax: 0.10.0
libtpu: 0.0.40
codegen_flags: <defaults>
</compile_context>

<pallas_src>
import functools
import math

import jax
import jax.numpy as jnp
import numpy as np
from jax.experimental import pallas as pl
from jax.experimental.pallas import tpu as pltpu


@functools.lru_cache(maxsize=None)
def _pos_encoding_table(channels: int, height: int, width: int):
    """(H*W, C) positional table, mirroring the PyTorch forward exactly
    (including its broadcasting quirks). Computed host-side in float64, cast
    to float32 — a trace-time constant, zero runtime cost."""
    q = channels // 4
    if q < 1 or 4 * q != channels:
        raise ValueError("channels must be a positive multiple of 4")
    if height != width:
        raise ValueError("torch.cat along dim=-1 in the reference requires height == width")
    y_pos = np.arange(height, dtype=np.float64)
    x_pos = np.arange(width, dtype=np.float64)
    div_term = np.exp(np.arange(0, q, 2, dtype=np.float64) * (-math.log(10000.0) / q))
    d = div_term.shape[0]
    if d not in (1, width):
        raise ValueError(
            "x(B,H,W,C) + pos(1,H,D,C) broadcast requires D == 1 or D == W "
            f"(got D={d}, W={width})")
    pos_y_sin = np.broadcast_to(np.sin(y_pos[:, None] * div_term)[:, :, None], (height, d, q))
    pos_y_cos = np.broadcast_to(np.cos(y_pos[:, None] * div_term)[:, :, None], (height, d, q))
    pos_x_sin = np.broadcast_to(np.sin(x_pos[:, None] * div_term)[:, :, None], (width, d, q))
    pos_x_cos = np.broadcast_to(np.cos(x_pos[:, None] * div_term)[:, :, None], (width, d, q))
    pos = np.concatenate([pos_y_sin, pos_y_cos, pos_x_sin, pos_x_cos], axis=-1)  # (H, D, C)
    # The torch add broadcasts the D axis against W (either D == W or D == 1).
    pos = np.broadcast_to(pos, (height, width, channels)).reshape(height * width, channels)
    return jnp.asarray(pos, dtype=jnp.float32)


def _add_pos_kernel(x_ref, pos_ref, o_ref):
    # x_ref / o_ref: (1, N, C) block for one batch element.
    # pos_ref: (N, C), VMEM-resident (constant block index across grid steps).
    o_ref[0] = x_ref[0] + pos_ref[...]


def sinusoidal_positional_encoding_2d(inputs, *, channels, height, width):
    """inputs: (B, H*W, C) or (B, H*W + 1, C) with a leading class token."""
    B, S, C = inputs.shape
    if C != channels:
        raise ValueError(f"expected {channels} channels, got {C}")
    n_tokens = height * width

    if S > n_tokens:
        # Class token passes through unchanged — pure data movement, handled in
        # the wrapper rather than in-kernel (no Pallas win at these sizes).
        cls_tok, x = inputs[:, :1, :], inputs[:, 1:, :]
    else:
        cls_tok, x = None, inputs
    if x.shape[1] != n_tokens:
        raise ValueError("sequence length must be H*W (or H*W + 1 with a class token)")

    pos = _pos_encoding_table(channels, height, width).astype(x.dtype)  # (N, C) constant

    out = pl.pallas_call(
        _add_pos_kernel,
        out_shape=jax.ShapeDtypeStruct((B, n_tokens, C), x.dtype),
        grid=(B,),
        in_specs=[
            pl.BlockSpec((1, n_tokens, C), lambda b: (b, 0, 0)),
            pl.BlockSpec((n_tokens, C), lambda b: (0, 0)),  # same block every step -> fetched once
        ],
        out_specs=pl.BlockSpec((1, n_tokens, C), lambda b: (b, 0, 0)),
        compiler_params=pltpu.CompilerParams(dimension_semantics=("parallel",)),
    )(x, pos)

    if cls_tok is not None:
        out = jnp.concatenate([cls_tok, out], axis=1)
    return out


def _reference_forward(inputs, channels, height, width):
    """Plain-JAX mirror of the PyTorch SinusoidalPositionalEncoding2D.forward."""
    if inputs.shape[1] > height * width:
        cls_token = inputs[:, 0:1, :]
        x = inputs[:, 1:, :]
    else:
        cls_token = None
        x = inputs
    batch_size, _, C = x.shape
    x = x.reshape(batch_size, height, width, C)
    y_pos = jnp.arange(height, dtype=jnp.float32)
    x_pos = jnp.arange(width, dtype=jnp.float32)
    q = C // 4
    div_term = jnp.exp(jnp.arange(0, q, 2, dtype=jnp.float32) * (-math.log(10000.0) / q))
    d = div_term.shape[0]
    pos_y_sin = jnp.broadcast_to(jnp.sin(y_pos[:, None] * div_term)[:, :, None], (height, d, q))
    pos_y_cos = jnp.broadcast_to(jnp.cos(y_pos[:, None] * div_term)[:, :, None], (height, d, q))
    pos_x_sin = jnp.broadcast_to(jnp.sin(x_pos[:, None] * div_term)[:, :, None], (width, d, q))
    pos_x_cos = jnp.broadcast_to(jnp.cos(x_pos[:, None] * div_term)[:, :, None], (width, d, q))
    pos_enc = jnp.concatenate([pos_y_sin, pos_y_cos, pos_x_sin, pos_x_cos], axis=-1)
    x = x + pos_enc[None]
    x = x.reshape(batch_size, -1, C)
    if cls_token is not None:
        x = jnp.concatenate([cls_token, x], axis=1)
    return x


if __name__ == "__main__":
    # H = W = 16 are the module defaults; C = 128 satisfies the forward's
    # implicit D == W broadcast constraint and gives a lane-dense channel axis.
    B, H, W, C = 2, 16, 16, 128
    key = jax.random.PRNGKey(0)
    k0, k1 = jax.random.split(key)

    # Case 1: plain (B, H*W, C) input.
    x = jax.random.normal(k0, (B, H * W, C), dtype=jnp.float32)
    y = jax.block_until_ready(
        sinusoidal_positional_encoding_2d(x, channels=C, height=H, width=W))
    y_ref = _reference_forward(x, C, H, W)
    assert y.shape == (B, H * W, C)
    assert jnp.allclose(y, y_ref, atol=2e-5, rtol=2e-5), "mismatch vs reference (no cls token)"

    # Case 2: (B, H*W + 1, C) input with a leading class token (passes through).
    x_cls = jax.random.normal(k1, (B, H * W + 1, C), dtype=jnp.float32)
    y_cls = jax.block_until_ready(
        sinusoidal_positional_encoding_2d(x_cls, channels=C, height=H, width=W))
    y_cls_ref = _reference_forward(x_cls, C, H, W)
    assert y_cls.shape == (B, H * W + 1, C)
    assert jnp.allclose(y_cls, y_cls_ref, atol=2e-5, rtol=2e-5), "mismatch vs reference (cls token)"

    print("KERNEL_OK")
</pallas_src>

<mosaic_0001>
module attributes {stable_mosaic.version = 11 : i64} {
  func.func @_add_pos_kernel(%arg0: i32, %arg1: memref<1x256x128xf32, #tpu.memory_space<vmem>>, %arg2: memref<256x128xf32, #tpu.memory_space<vmem>>, %arg3: memref<1x256x128xf32, #tpu.memory_space<vmem>>) attributes {dimension_semantics = [#tpu.dimension_semantics<parallel>], iteration_bounds = array<i64: 2>, scalar_prefetch = 0 : i64, scratch_operands = 0 : i64, tpu.core_type = #tpu.core_type<tc>, window_params = [{transform_indices = @transform_0, window_bounds = array<i64: 1, 256, 128>}, {pipeline_mode = #tpu.pipeline_mode<synchronous>, transform_indices = @transform_1, window_bounds = array<i64: 256, 128>}, {transform_indices = @transform_2, window_bounds = array<i64: 1, 256, 128>}]} {
    %c0 = arith.constant 0 : index
    %c0_0 = arith.constant 0 : index
    %c0_1 = arith.constant 0 : index
    %0 = vector.load %arg1[%c0, %c0_0, %c0_1] : memref<1x256x128xf32, #tpu.memory_space<vmem>>, vector<1x256x128xf32>
    %1 = vector.shape_cast %0 : vector<1x256x128xf32> to vector<256x128xf32>
    %c0_2 = arith.constant 0 : index
    %c0_3 = arith.constant 0 : index
    %2 = vector.load %arg2[%c0_2, %c0_3] : memref<256x128xf32, #tpu.memory_space<vmem>>, vector<256x128xf32>
    %3 = arith.addf %1, %2 : vector<256x128xf32>
    %c0_4 = arith.constant 0 : index
    %c0_5 = arith.constant 0 : index
    %c0_6 = arith.constant 0 : index
    %4 = vector.load %arg3[%c0_4, %c0_5, %c0_6] : memref<1x256x128xf32, #tpu.memory_space<vmem>>, vector<1x256x128xf32>
    %5 = vector.shape_cast %4 : vector<1x256x128xf32> to vector<256x128xf32>
    %6 = vector.shape_cast %3 : vector<256x128xf32> to vector<1x256x128xf32>
    tpu.vector_store %arg3[%c0_4, %c0_5, %c0_6], %6 {strides = array<i32>} : memref<1x256x128xf32, #tpu.memory_space<vmem>>, vector<1x256x128xf32>,
    return
  }
  func.func @transform_0(%arg0: i32) -> (i32, i32, i32) {
    %c0_i32 = arith.constant 0 : i32
    %c0_i32_0 = arith.constant 0 : i32
    %c0_i32_1 = arith.constant 0 : i32
    return %arg0, %c0_i32, %c0_i32_0 : i32, i32, i32
  }
  func.func @transform_1(%arg0: i32) -> (i32, i32) {
    %c0_i32 = arith.constant 0 : i32
    %c0_i32_0 = arith.constant 0 : i32
    %c0_i32_1 = arith.constant 0 : i32
    return %c0_i32, %c0_i32_0 : i32, i32
  }
  func.func @transform_2(%arg0: i32) -> (i32, i32, i32) {
    %c0_i32 = arith.constant 0 : i32
    %c0_i32_0 = arith.constant 0 : i32
    %c0_i32_1 = arith.constant 0 : i32
    return %arg0, %c0_i32, %c0_i32_0 : i32, i32, i32
  }
}

</mosaic_0001>

<llo_original>
// kernel: tpu_custom_call.1
$region0: #{tpu_custom_call.1}
  #allocation0 [shape = 'u32[]', space=smem, size = 0x4, offset = 0x4, fixed_abs, tag = 'smem constant byte address 0x4 - core index']
  #allocation1 [shape = 'u32[72,128]{1,0:T(1,128)}', space=vmem, size = 0x9000, scoped, tag = 'internal scratch']
  %s0 = inlined_call_operand.hbm [shape: f32[2,256,128], index: 0, kind: input, shape index: {}]
  %s1 = inlined_call_operand.hbm [shape: f32[256,128], index: 1, kind: input, shape index: {}]
  %s2 = inlined_call_operand.hbm [shape: f32[2,256,128], index: 2, kind: output, shape index: {}]
  %s3 = sld [smem:[#allocation0]]
  $region49: #{tpu_custom_call.1} parent=0
    _
  %s5 = ssub.s32 1, %s3
  %s6 = scalar_select 0, %s5, %s3
  $region1: #{tpu_custom_call.1} parent=0
    #allocation2 [shape = 'u8[262144]{0}', space=vmem, size = 0x40000, scoped, tag = 'input window, operand 0']
    #allocation3 [shape = 's32[2]{0}', space=sflag, size = 0x8, scoped, tag = 'scoped memory for tpu_custom_call.1']
    #allocation4 [shape = 's32[2]{0}', space=sflag, size = 0x8, scoped, tag = 'scoped memory for tpu_custom_call.1']
    #allocation5 [shape = 'u8[131072]{0}', space=vmem, size = 0x20000, scoped, tag = 'input window, operand 1, single buffered']
    #allocation6 [shape = 's32[1]{0}', space=sflag, size = 0x4, scoped, tag = 'scoped memory for tpu_custom_call.1']
    #allocation7 [shape = 'u8[262144]{0}', space=vmem, size = 0x40000, scoped, tag = 'output window, operand 0']
    %7 = vsyncpa [#allocation3], 0
    %s8 = scalar_lea.sflag [#allocation3], 1
    %9 = vsyncpa %s8, 0
    %10 = vsyncpa [#allocation6], 0
    %11 = vsyncpa [#allocation4], 0
    %s12 = scalar_lea.sflag [#allocation4], 1
    %13 = vsyncpa %s12, 0
    loop: start=0, step=1, limit=4
    $region2: #{tpu_custom_call.1} parent=1 // loop_pre_header
      _
    $region3: #{tpu_custom_call.1} parent=1 // loop_header
      %s15 = sphi 0, %s19
      %p16 = scmp.ge.s32.totalorder %s15, 4
      %s25 = sphi 0, %s27
      %s28 = sphi 0, %s25
      %s29 = sphi 0, %s28
      %s45 = sphi 0, %s29
      %s49 = sphi 0, %s49
      %s51 = sphi 0, %s49
      %s52 = sphi 0, %s51
      %s66 = sphi 0, %s52
      %s72 = sphi 0, %s74
      %s75 = sphi 0, %s72
      %s76 = sphi 0, %s75
      %s92 = sphi 0, %s76
    $region4: #{tpu_custom_call.1} parent=1 // loop_header_branch
      %18 = sbr.rel (%p16) target = $region8
    $region5: #{tpu_custom_call.1} parent=1 // loop_body
      %s20 = ssub.s32 %s15, 1
      %s21 = ssub.s32 %s15, 2
      %s22 = sadd.s32 %s15, 1
      %s23 = ssub.s32 %s15, %s22
      %p24 = scmp.eq.s32.totalorder %s23, 0
      %s26 = sadd.s32 %s25, 1
      %s27 = scalar_select %p24, %s25, %s26
      %p30 = pneg %p24
      %p31 = scmp.eq.s32.totalorder %s15, 1
      %p32 = por %p30, %p31
      %p33 = scmp.ne.s32.totalorder %s25, %s28
      %p34 = scmp.eq.s32.totalorder %s15, 0
      %p35 = por %p33, %p34
      %p36 = scmp.ne.s32.totalorder %s25, %s28
      %p37 = scmp.eq.s32.totalorder %s20, 1
      %p38 = por %p36, %p37
      %p39 = scmp.ne.s32.totalorder %s28, %s29
      %p40 = scmp.eq.s32.totalorder %s20, 0
      %p41 = por %p39, %p40
      %p42 = scmp.ne.s32.totalorder %s28, %s29
      %p43 = scmp.eq.s32.totalorder %s21, 1
      %p44 = por %p42, %p43
      %p46 = scmp.ne.s32.totalorder %s29, %s45
      %p47 = scmp.eq.s32.totalorder %s21, 0
      %p48 = por %p46, %p47
      %s50 = sadd.s32 %s49, 1
      %p53 = scmp.eq.s32.totalorder %s15, 1
      %p54 = scmp.ne.s32.totalorder %s49, %s51
      %p55 = scmp.eq.s32.totalorder %s15, 0
      %p56 = por %p54, %p55
      %p57 = scmp.ne.s32.totalorder %s49, %s51
      %p58 = scmp.eq.s32.totalorder %s20, 1
      %p59 = por %p57, %p58
      %p60 = scmp.ne.s32.totalorder %s51, %s52
      %p61 = scmp.eq.s32.totalorder %s20, 0
      %p62 = por %p60, %p61
      %p63 = scmp.ne.s32.totalorder %s51, %s52
      %p64 = scmp.eq.s32.totalorder %s21, 1
      %p65 = por %p63, %p64
      %p67 = scmp.ne.s32.totalorder %s52, %s66
      %p68 = scmp.eq.s32.totalorder %s21, 0
      %p69 = por %p67, %p68
      %s70 = ssub.s32 %s15, %s22
      %p71 = scmp.eq.s32.totalorder %s70, 0
      %s73 = sadd.s32 %s72, 1
      %s74 = scalar_select %p71, %s72, %s73
      %p77 = pneg %p71
      %p78 = scmp.eq.s32.totalorder %s15, 1
      %p79 = por %p77, %p78
      %p80 = scmp.ne.s32.totalorder %s72, %s75
      %p81 = scmp.eq.s32.totalorder %s15, 0
      %p82 = por %p80, %p81
      %p83 = scmp.ne.s32.totalorder %s72, %s75
      %p84 = scmp.eq.s32.totalorder %s20, 1
      %p85 = por %p83, %p84
      %p86 = scmp.ne.s32.totalorder %s75, %s76
      %p87 = scmp.eq.s32.totalorder %s20, 0
      %p88 = por %p86, %p87
      %p89 = scmp.ne.s32.totalorder %s75, %s76
      %p90 = scmp.eq.s32.totalorder %s21, 1
      %p91 = por %p89, %p90
      %p93 = scmp.ne.s32.totalorder %s76, %s92
      %p94 = scmp.eq.s32.totalorder %s21, 0
      %p95 = por %p93, %p94
      %p96 = scmp.le.s32.totalorder 1, %s15
      %p97 = scmp.lt.s32.totalorder %s15, 3
      %p98 = pnand %p96, %p97
      %p99 = pneg %p98
      // Predicated region
      $region9: #{tpu_custom_call.1} parent=5 // pred_check
        _
      $region10: #{tpu_custom_call.1} parent=5 // pred_check_branch
        %101 = sbr.rel (%p98) target = $region12
      $region11: #{tpu_custom_call.1} parent=5 // pred_region
        %s102 = ssub.s32 %s15, 1
        // Predicated region
        $region13: #{tpu_custom_call.1} parent=11 // pred_check
          %p103 = pneg %p62
        $region14: #{tpu_custom_call.1} parent=11 // pred_check_branch
          %105 = sbr.rel (%p103) target = $region16
        $region15: #{tpu_custom_call.1} parent=11 // pred_region
          %107 = vsyncadd [#allocation6], 0
          %s108 = sshll.u32 %s1, 4
          %s109 = int_to_ptr.hbm [resolvable:$true] %s108
          %s110 = sshll.u32 [#allocation5], 4
          %s111 = int_to_ptr.vmem [resolvable:$true] %s110
          %116 = dma.hbm_to_vmem [thread:$0]  %s109, 4096, %s111, [#allocation6], 128, 128, 8
        $region16: #{tpu_custom_call.1} parent=11 // pred_fallthru
          _
      $region12: #{tpu_custom_call.1} parent=5 // pred_fallthru
        _
      %p117 = scmp.lt.s32.totalorder %s15, 2
      // Predicated region
      $region17: #{tpu_custom_call.1} parent=5 // pred_check
        %p118 = pneg %p117
      $region18: #{tpu_custom_call.1} parent=5 // pred_check_branch
        %120 = sbr.rel (%p118) target = $region20
      $region19: #{tpu_custom_call.1} parent=5 // pred_region
        // Predicated region
        $region21: #{tpu_custom_call.1} parent=19 // pred_check
          %p121 = pneg %p35
        $region22: #{tpu_custom_call.1} parent=19 // pred_check_branch
          %123 = sbr.rel (%p121) target = $region24
        $region23: #{tpu_custom_call.1} parent=19 // pred_region
          %s124 = sand.u32 %s25, 1
          %s125 = scalar_lea.sflag [#allocation3], %s124
          %s126 = sand.u32 %s25, 1
          %s127 = smul.addr %s126, 256
          %s128 = scalar_lea.vmem [#allocation2], %s127
          %130 = vsyncadd %s125, 0
          %s131 = smul.addr %s15, 32
          %s132 = smul.addr %s131, 8
          %s133 = scalar_lea.hbm %s0, %s132
          %s134 = sshll.u32 %s133, 4
          %s135 = int_to_ptr.hbm [resolvable:$true] %s134
          %s136 = sshll.u32 %s128, 4
          %s137 = int_to_ptr.vmem [resolvable:$true] %s136
          %142 = dma.hbm_to_vmem [thread:$0]  %s135, 4096, %s137, %s125, 128, 128, 8
        $region24: #{tpu_custom_call.1} parent=19 // pred_fallthru
          _
      $region20: #{tpu_custom_call.1} parent=5 // pred_fallthru
        _
      %p143 = scmp.le.s32.totalorder 1, %s15
      %p144 = scmp.lt.s32.totalorder %s15, 3
      %p145 = pnand %p143, %p144
      %p146 = pneg %p145
      // Predicated region
      $region25: #{tpu_custom_call.1} parent=5 // pred_check
        _
      $region26: #{tpu_custom_call.1} parent=5 // pred_check_branch
        %148 = sbr.rel (%p145) target = $region28
      $region27: #{tpu_custom_call.1} parent=5 // pred_region
        %s149 = ssub.s32 %s15, 1
        %s150 = sand.u32 %s28, 1
        %s151 = scalar_lea.sflag [#allocation3], %s150
        %s152 = sand.u32 %s28, 1
        %s153 = smul.addr %s152, 256
        %s154 = scalar_lea.vmem [#allocation2], %s153
        // Predicated region
        $region29: #{tpu_custom_call.1} parent=27 // pred_check
          %p155 = pneg %p41
        $region30: #{tpu_custom_call.1} parent=27 // pred_check_branch
          %157 = sbr.rel (%p155) target = $region32
        $region31: #{tpu_custom_call.1} parent=27 // pred_region
          %159 = dma.done %s151, 4096
        $region32: #{tpu_custom_call.1} parent=27 // pred_fallthru
          _
        // Predicated region
        $region33: #{tpu_custom_call.1} parent=27 // pred_check
          %p160 = pneg %p62
        $region34: #{tpu_custom_call.1} parent=27 // pred_check_branch
          %162 = sbr.rel (%p160) target = $region36
        $region35: #{tpu_custom_call.1} parent=27 // pred_region
          %164 = dma.done [#allocation6], 4096
        $region36: #{tpu_custom_call.1} parent=27 // pred_fallthru
          _
        %s165 = sand.u32 %s28, 1
        %s166 = scalar_lea.sflag [#allocation3], %s165
        %s167 = sand.u32 %s28, 1
        %s168 = smul.addr %s167, 256
        %s169 = scalar_lea.vmem [#allocation2], %s168
        %p170 = pneg %p41
        %p171 = pneg %p38
        %p172 = pneg %p62
        %p173 = pneg %p59
        %p174 = pneg %p88
        %p175 = pneg %p85
        %s176 = sand.u32 %s75, 1
        %s177 = scalar_lea.sflag [#allocation4], %s176
        %s178 = sand.u32 %s75, 1
        %s179 = smul.addr %s178, 256
        %s180 = scalar_lea.vmem [#allocation7], %s179
        %v181 = vld [vmem:[%s154] sm:$0xff]
        %v182 = vld [vmem:[%s154 + $0x8] sm:$0xff]
        %v183 = vld [vmem:[%s154 + $0x10] sm:$0xff]
        %v184 = vld [vmem:[%s154 + $0x18] sm:$0xff]
        %v185 = vld [vmem:[%s154 + $0x20] sm:$0xff]
        %v186 = vld [vmem:[%s154 + $0x28] sm:$0xff]
        %v187 = vld [vmem:[%s154 + $0x30] sm:$0xff]
        %v188 = vld [vmem:[%s154 + $0x38] sm:$0xff]
        %v189 = vld [vmem:[%s154 + $0x40] sm:$0xff]
        %v190 = vld [vmem:[%s154 + $0x48] sm:$0xff]
        %v191 = vld [vmem:[%s154 + $0x50] sm:$0xff]
        %v192 = vld [vmem:[%s154 + $0x58] sm:$0xff]
        %v193 = vld [vmem:[%s154 + $0x60] sm:$0xff]
        %v194 = vld [vmem:[%s154 + $0x68] sm:$0xff]
        %v195 = vld [vmem:[%s154 + $0x70] sm:$0xff]
        %v196 = vld [vmem:[%s154 + $0x78] sm:$0xff]
        %v197 = vld [vmem:[%s154 + $0x80] sm:$0xff]
        %v198 = vld [vmem:[%s154 + $0x88] sm:$0xff]
        %v199 = vld [vmem:[%s154 + $0x90] sm:$0xff]
        %v200 = vld [vmem:[%s154 + $0x98] sm:$0xff]
        %v201 = vld [vmem:[%s154 + $0xa0] sm:$0xff]
        %v202 = vld [vmem:[%s154 + $0xa8] sm:$0xff]
        %v203 = vld [vmem:[%s154 + $0xb0] sm:$0xff]
        %v204 = vld [vmem:[%s154 + $0xb8] sm:$0xff]
        %v205 = vld [vmem:[%s154 + $0xc0] sm:$0xff]
        %v206 = vld [vmem:[%s154 + $0xc8] sm:$0xff]
        %v207 = vld [vmem:[%s154 + $0xd0] sm:$0xff]
        %v208 = vld [vmem:[%s154 + $0xd8] sm:$0xff]
        %v209 = vld [vmem:[%s154 + $0xe0] sm:$0xff]
        %v210 = vld [vmem:[%s154 + $0xe8] sm:$0xff]
        %v211 = vld [vmem:[%s154 + $0xf0] sm:$0xff]
        %v212 = vld [vmem:[%s154 + $0xf8] sm:$0xff]
        %v213 = vld [vmem:[#allocation5] sm:$0xff]
        %v214 = vld [vmem:[#allocation5 + $0x8] sm:$0xff]
        %v215 = vld [vmem:[#allocation5 + $0x10] sm:$0xff]
        %v216 = vld [vmem:[#allocation5 + $0x18] sm:$0xff]
        %v217 = vld [vmem:[#allocation5 + $0x20] sm:$0xff]
        %v218 = vld [vmem:[#allocation5 + $0x28] sm:$0xff]
        %v219 = vld [vmem:[#allocation5 + $0x30] sm:$0xff]
        %v220 = vld [vmem:[#allocation5 + $0x38] sm:$0xff]
        %v221 = vld [vmem:[#allocation5 + $0x40] sm:$0xff]
        %v222 = vld [vmem:[#allocation5 + $0x48] sm:$0xff]
        %v223 = vld [vmem:[#allocation5 + $0x50] sm:$0xff]
        %v224 = vld [vmem:[#allocation5 + $0x58] sm:$0xff]
        %v225 = vld [vmem:[#allocation5 + $0x60] sm:$0xff]
        %v226 = vld [vmem:[#allocation5 + $0x68] sm:$0xff]
        %v227 = vld [vmem:[#allocation5 + $0x70] sm:$0xff]
        %v228 = vld [vmem:[#allocation5 + $0x78] sm:$0xff]
        %v229 = vld [vmem:[#allocation5 + $0x80] sm:$0xff]
        %v230 = vld [vmem:[#allocation5 + $0x88] sm:$0xff]
        %v231 = vld [vmem:[#allocation5 + $0x90] sm:$0xff]
        %v232 = vld [vmem:[#allocation5 + $0x98] sm:$0xff]
        %v233 = vld [vmem:[#allocation5 + $0xa0] sm:$0xff]
        %v234 = vld [vmem:[#allocation5 + $0xa8] sm:$0xff]
        %v235 = vld [vmem:[#allocation5 + $0xb0] sm:$0xff]
        %v236 = vld [vmem:[#allocation5 + $0xb8] sm:$0xff]
        %v237 = vld [vmem:[#allocation5 + $0xc0] sm:$0xff]
        %v238 = vld [vmem:[#allocation5 + $0xc8] sm:$0xff]
        %v239 = vld [vmem:[#allocation5 + $0xd0] sm:$0xff]
        %v240 = vld [vmem:[#allocation5 + $0xd8] sm:$0xff]
        %v241 = vld [vmem:[#allocation5 + $0xe0] sm:$0xff]
        %v242 = vld [vmem:[#allocation5 + $0xe8] sm:$0xff]
        %v243 = vld [vmem:[#allocation5 + $0xf0] sm:$0xff]
        %v244 = vld [vmem:[#allocation5 + $0xf8] sm:$0xff]
        %v245 = vadd.f32 %v181, %v213
        %v246 = vadd.f32 %v182, %v214
        %v247 = vadd.f32 %v183, %v215
        %v248 = vadd.f32 %v184, %v216
        %v249 = vadd.f32 %v185, %v217
        %v250 = vadd.f32 %v186, %v218
        %v251 = vadd.f32 %v187, %v219
        %v252 = vadd.f32 %v188, %v220
        %v253 = vadd.f32 %v189, %v221
        %v254 = vadd.f32 %v190, %v222
        %v255 = vadd.f32 %v191, %v223
        %v256 = vadd.f32 %v192, %v224
        %v257 = vadd.f32 %v193, %v225
        %v258 = vadd.f32 %v194, %v226
        %v259 = vadd.f32 %v195, %v227
        %v260 = vadd.f32 %v196, %v228
        %v261 = vadd.f32 %v197, %v229
        %v262 = vadd.f32 %v198, %v230
        %v263 = vadd.f32 %v199, %v231
        %v264 = vadd.f32 %v200, %v232
        %v265 = vadd.f32 %v201, %v233
        %v266 = vadd.f32 %v202, %v234
        %v267 = vadd.f32 %v203, %v235
        %v268 = vadd.f32 %v204, %v236
        %v269 = vadd.f32 %v205, %v237
        %v270 = vadd.f32 %v206, %v238
        %v271 = vadd.f32 %v207, %v239
        %v272 = vadd.f32 %v208, %v240
        %v273 = vadd.f32 %v209, %v241
        %v274 = vadd.f32 %v210, %v242
        %v275 = vadd.f32 %v211, %v243
        %v276 = vadd.f32 %v212, %v244
        %277 = vst [vmem:[%s180] sm:$0xff] %v245
        %278 = vst [vmem:[%s180 + $0x8] sm:$0xff] %v246
        %279 = vst [vmem:[%s180 + $0x10] sm:$0xff] %v247
        %280 = vst [vmem:[%s180 + $0x18] sm:$0xff] %v248
        %281 = vst [vmem:[%s180 + $0x20] sm:$0xff] %v249
        %282 = vst [vmem:[%s180 + $0x28] sm:$0xff] %v250
        %283 = vst [vmem:[%s180 + $0x30] sm:$0xff] %v251
        %284 = vst [vmem:[%s180 + $0x38] sm:$0xff] %v252
        %285 = vst [vmem:[%s180 + $0x40] sm:$0xff] %v253
        %286 = vst [vmem:[%s180 + $0x48] sm:$0xff] %v254
        %287 = vst [vmem:[%s180 + $0x50] sm:$0xff] %v255
        %288 = vst [vmem:[%s180 + $0x58] sm:$0xff] %v256
        %289 = vst [vmem:[%s180 + $0x60] sm:$0xff] %v257
        %290 = vst [vmem:[%s180 + $0x68] sm:$0xff] %v258
        %291 = vst [vmem:[%s180 + $0x70] sm:$0xff] %v259
        %292 = vst [vmem:[%s180 + $0x78] sm:$0xff] %v260
        %293 = vst [vmem:[%s180 + $0x80] sm:$0xff] %v261
        %294 = vst [vmem:[%s180 + $0x88] sm:$0xff] %v262
        %295 = vst [vmem:[%s180 + $0x90] sm:$0xff] %v263
        %296 = vst [vmem:[%s180 + $0x98] sm:$0xff] %v264
        %297 = vst [vmem:[%s180 + $0xa0] sm:$0xff] %v265
        %298 = vst [vmem:[%s180 + $0xa8] sm:$0xff] %v266
        %299 = vst [vmem:[%s180 + $0xb0] sm:$0xff] %v267
        %300 = vst [vmem:[%s180 + $0xb8] sm:$0xff] %v268
        %301 = vst [vmem:[%s180 + $0xc0] sm:$0xff] %v269
        %302 = vst [vmem:[%s180 + $0xc8] sm:$0xff] %v270
        %303 = vst [vmem:[%s180 + $0xd0] sm:$0xff] %v271
        %304 = vst [vmem:[%s180 + $0xd8] sm:$0xff] %v272
        %305 = vst [vmem:[%s180 + $0xe0] sm:$0xff] %v273
        %306 = vst [vmem:[%s180 + $0xe8] sm:$0xff] %v274
        %307 = vst [vmem:[%s180 + $0xf0] sm:$0xff] %v275
        %308 = vst [vmem:[%s180 + $0xf8] sm:$0xff] %v276
        %s309 = sand.u32 %s75, 1
        %s310 = scalar_lea.sflag [#allocation4], %s309
        %s311 = sand.u32 %s75, 1
        %s312 = smul.addr %s311, 256
        %s313 = scalar_lea.vmem [#allocation7], %s312
        // Predicated region
        $region37: #{tpu_custom_call.1} parent=27 // pred_check
          %p314 = pneg %p85
        $region38: #{tpu_custom_call.1} parent=27 // pred_check_branch
          %316 = sbr.rel (%p314) target = $region40
        $region39: #{tpu_custom_call.1} parent=27 // pred_region
          %318 = vsyncadd %s310, 0
          %s319 = smul.addr %s20, 32
          %s320 = smul.addr %s319, 8
          %s321 = scalar_lea.hbm %s2, %s320
          %s322 = sshll.u32 %s313, 4
          %s323 = int_to_ptr.vmem [resolvable:$true] %s322
          %s324 = sshll.u32 %s321, 4
          %s325 = int_to_ptr.hbm [resolvable:$true] %s324
          %330 = dma.vmem_to_hbm [thread:$0]  %s323, 4096, %s325, %s310, 128, 128, 8
        $region40: #{tpu_custom_call.1} parent=27 // pred_fallthru
          _
      $region28: #{tpu_custom_call.1} parent=5 // pred_fallthru
        _
      %p331 = scmp.le.s32.totalorder 2, %s15
      // Predicated region
      $region41: #{tpu_custom_call.1} parent=5 // pred_check
        %p332 = pneg %p331
      $region42: #{tpu_custom_call.1} parent=5 // pred_check_branch
        %334 = sbr.rel (%p332) target = $region44
      $region43: #{tpu_custom_call.1} parent=5 // pred_region
        %s335 = ssub.s32 %s15, 2
        // Predicated region
        $region45: #{tpu_custom_call.1} parent=43 // pred_check
          %p336 = pneg %p91
        $region46: #{tpu_custom_call.1} parent=43 // pred_check_branch
          %338 = sbr.rel (%p336) target = $region48
        $region47: #{tpu_custom_call.1} parent=43 // pred_region
          %s339 = sand.u32 %s76, 1
          %s340 = scalar_lea.sflag [#allocation4], %s339
          %s341 = sand.u32 %s76, 1
          %s342 = smul.addr %s341, 256
          %s343 = scalar_lea.vmem [#allocation7], %s342
          %345 = dma.done %s340, 4096
        $region48: #{tpu_custom_call.1} parent=43 // pred_fallthru
          _
      $region44: #{tpu_custom_call.1} parent=5 // pred_fallthru
        _
    $region6: #{tpu_custom_call.1} parent=1 // loop_footer
      %s19 = sadd.s32 1, %s15
    $region7: #{tpu_custom_call.1} parent=1 // loop_footer_branch
      %14 = sbr.rel target = $region3
    $region8: #{tpu_custom_call.1} parent=1 // loop_exit
      _
    %346 = vsyncpa [#allocation3], 1
    %s347 = scalar_lea.sflag [#allocation3], 1
    %348 = vsyncpa %s347, 1
    %349 = vsyncpa [#allocation6], 1
    %350 = vsyncpa [#allocation4], 1
    %s351 = scalar_lea.sflag [#allocation4], 1
    %352 = vsyncpa %s351, 1

</llo_original>
